<compile_context>
chip_gen: v6e
topology: v6e:2x2x1
jax: 0.10.0
libtpu: 0.0.40
codegen_flags: <defaults>
</compile_context>

<pallas_src>
import jax
import jax.numpy as jnp
import numpy as np
from jax.experimental import pallas as pl
from jax.experimental.pallas import tpu as pltpu


# ----------------------------- Pallas kernel ------------------------------ #
def _prefix_adapter_kernel(x_ref, attn_ref, wq_ref, bq_ref,
                           pk_bd_ref, pv_bd_ref, segd_ref, lam_ref, z_ref):
    """One row tile: z = (1-λ)·attn + λ·merge(softmax(split(x Wq + b) Pkᵀ) Pv)."""
    lam = lam_ref[0]                                   # scalar, SMEM (scalar path)

    # q_proj: bf16 operands -> f32 accumulation on the MXU.
    q = jnp.dot(x_ref[...], wq_ref[...],
                preferred_element_type=jnp.float32) + bq_ref[...]          # [T, Dp] f32

    # All heads at once: scores against the block-diagonal prefix keys.
    s = jnp.dot(q.astype(pk_bd_ref.dtype), pk_bd_ref[...],
                preferred_element_type=jnp.float32)                        # [T, HLp] f32

    # Per-row shift: same constant within every L-segment -> per-head softmax
    # unchanged. Padded score columns are 0, so the shift keeps every exp() <= 1.
    m = jnp.max(s, axis=-1, keepdims=True)                                 # XLU reduce
    e = jnp.exp(s - m)                                                     # f32, EUP
    e16 = e.astype(pv_bd_ref.dtype)

    num = jnp.dot(e16, pv_bd_ref[...], preferred_element_type=jnp.float32)  # [T, Dp]
    den = jnp.dot(e16, segd_ref[...], preferred_element_type=jnp.float32)   # per-head sums
    y = num * pl.reciprocal(den, approx=True)          # softmax(q Pkᵀ) Pv, heads merged

    attn = attn_ref[...]                                                    # f32
    z_ref[...] = (attn + lam * (y - attn)).astype(z_ref.dtype)              # (1-λ)attn + λy


def _round_up(n, m):
    return ((n + m - 1) // m) * m


def prefix_adapter_pallas(x, attn_out, wq, bq, pk, pv, lam, *, row_tile=256):
    """x, attn_out: [B,S,D]; wq: [D,D]; bq: [D]; pk,pv: [L,HD]; lam: [1]."""
    B, S, D = x.shape
    L, HD = pk.shape
    H = D // HD
    assert H * HD == D

    rows = B * S
    Dp = _round_up(D, 128)            # lane-dense hidden dim
    HL = H * L
    HLp = _round_up(HL, 128)          # lane-dense scores dim
    TM = row_tile if rows >= row_tile else _round_up(rows, 8)
    Rp = _round_up(rows, TM)
    # NOTE(v7x): 64 MiB VMEM / 2 TCs — for production-sized D halve row_tile and
    # tile Wq over its output columns; demo sizes are far below any limit.

    cdt = jnp.bfloat16                # MXU operand dtype (native on v5e/v6e/v7x)
    f32 = jnp.float32

    # ---- wrapper-side layout plumbing: flatten tokens, zero-pad lane-dense ----
    x2 = x.reshape(rows, D)
    a2 = attn_out.reshape(rows, D).astype(f32)
    x_p = jnp.zeros((Rp, Dp), cdt).at[:rows, :D].set(x2.astype(cdt))
    a_p = jnp.zeros((Rp, Dp), f32).at[:rows, :D].set(a2)
    wq_p = jnp.zeros((Dp, Dp), cdt).at[:D, :D].set(wq.astype(cdt))
    bq_p = jnp.zeros((1, Dp), f32).at[:, :D].set(bq.reshape(1, D).astype(f32))

    # Block-diagonal prefix projections (built once, resident in VMEM):
    #   Pk_bd[d, h*L+l] = Pk[l, d-h*HD]     -> scores = q @ Pk_bd (all heads)
    #   Pv_bd[h*L+l, d] = Pv[l, d-h*HD]     -> num    = e @ Pv_bd
    #   SegD [h*L+l, d] = 1 iff d//HD == h  -> den    = e @ SegD  (per-head sum)
    pk_bd = jnp.zeros((Dp, HLp), cdt)
    pv_bd = jnp.zeros((HLp, Dp), cdt)
    seg_d = jnp.zeros((HLp, Dp), cdt)
    for h in range(H):
        rs, re = h * HD, (h + 1) * HD
        cs, ce = h * L, (h + 1) * L
        pk_bd = pk_bd.at[rs:re, cs:ce].set(pk.T.astype(cdt))
        pv_bd = pv_bd.at[cs:ce, rs:re].set(pv.astype(cdt))
        seg_d = seg_d.at[cs:ce, rs:re].set(jnp.ones((L, HD), cdt))
    if Dp > D:
        # Keep denominators of the (discarded) padded output columns > 0: no NaNs.
        seg_d = seg_d.at[:, D:].set(jnp.ones((HLp, Dp - D), cdt))

    lam1 = lam.reshape(1).astype(f32)

    grid = (Rp // TM,)
    z_p = pl.pallas_call(
        _prefix_adapter_kernel,
        out_shape=jax.ShapeDtypeStruct((Rp, Dp), x.dtype),
        grid_spec=pltpu.PrefetchScalarGridSpec(
            num_scalar_prefetch=0,
            grid=grid,
            in_specs=[
                pl.BlockSpec((TM, Dp), lambda r: (r, 0)),          # x tokens  (bf16)
                pl.BlockSpec((TM, Dp), lambda r: (r, 0)),          # attn_out  (f32)
                pl.BlockSpec((Dp, Dp), lambda r: (0, 0)),          # Wq        (resident)
                pl.BlockSpec((1, Dp), lambda r: (0, 0)),           # bq        (resident)
                pl.BlockSpec((Dp, HLp), lambda r: (0, 0)),         # Pk block-diag
                pl.BlockSpec((HLp, Dp), lambda r: (0, 0)),         # Pv block-diag
                pl.BlockSpec((HLp, Dp), lambda r: (0, 0)),         # segment->dim ones
                pl.BlockSpec(memory_space=pltpu.MemorySpace.SMEM), # λ scalar
            ],
            out_specs=pl.BlockSpec((TM, Dp), lambda r: (r, 0)),
        ),
        compiler_params=pltpu.CompilerParams(
            dimension_semantics=("parallel",)),     # independent row tiles
    )(x_p, a_p, wq_p, bq_p, pk_bd, pv_bd, seg_d, lam1)

    return z_p[:rows, :D].reshape(B, S, D)


# --------------------- plain-JAX pieces (glue / reference) ----------------- #
def mha_attention(x, p, num_heads):
    """Stand-in for the wrapped `attention_module` (plain JAX, deterministic)."""
    B, S, D = x.shape
    hd = D // num_heads

    def split(t):
        return t.reshape(B, S, num_heads, hd).transpose(0, 2, 1, 3)  # [B,H,S,HD]

    q = split(x @ p["wq"] + p["bq"])
    k = split(x @ p["wk"] + p["bk"])
    v = split(x @ p["wv"] + p["bv"])
    scores = jnp.einsum("bhqd,bhkd->bhqk", q, k) / jnp.sqrt(jnp.float32(hd))
    probs = jax.nn.softmax(scores, axis=-1)
    ctx = jnp.einsum("bhqk,bhkd->bhqd", probs, v)
    ctx = ctx.transpose(0, 2, 1, 3).reshape(B, S, D)
    return ctx @ p["wo"] + p["bo"]


def prefix_adapter_reference(x, attn_out, wq, bq, pk, pv, lam):
    B, S, D = x.shape
    L, HD = pk.shape
    H = D // HD
    q = x @ wq + bq                                        # q_proj
    q = q.reshape(B, S, H, HD).transpose(0, 2, 1, 3)       # split_heads -> [B,H,S,HD]
    s = jnp.einsum("bhsd,ld->bhsl", q, pk)                 # q @ Pk^T
    p = jax.nn.softmax(s, axis=-1)
    y = jnp.einsum("bhsl,ld->bhsd", p, pv)                 # @ Pv
    y = y.transpose(0, 2, 1, 3).reshape(B, S, D)           # merge_heads
    lam_s = lam.reshape(())
    return (1.0 - lam_s) * attn_out + lam_s * y


# ---------------------------------- main ----------------------------------- #
if __name__ == "__main__":
    # Small shapes consistent with the module: dim divisible by num_heads.
    B, S, D = 2, 8, 32
    NUM_HEADS = 8
    HEAD_DIM = D // NUM_HEADS
    L = 20
    INIT_STD = 0.001

    key = jax.random.PRNGKey(0)
    keys = jax.random.split(key, 16)

    x = jax.random.normal(keys[0], (B, S, D), dtype=jnp.float32)

    # adapter parameters (deterministic, matching __init__ / init_weights shapes)
    pk = INIT_STD * jax.random.normal(keys[1], (L, HEAD_DIM), dtype=jnp.float32)
    pv = INIT_STD * jax.random.normal(keys[2], (L, HEAD_DIM), dtype=jnp.float32)
    lam = jax.random.uniform(keys[3], (1,), dtype=jnp.float32)     # adapter_λ ∈ [0,1)

    # q_proj: Linear(D, D) default-style init
    bound = 1.0 / np.sqrt(D)
    wq = jax.random.uniform(keys[4], (D, D), jnp.float32, -bound, bound)
    bq = jax.random.uniform(keys[5], (D,), jnp.float32, -bound, bound)

    # attention_module stand-in parameters (plain JAX)
    attn_params = {
        "wq": jax.random.uniform(keys[6], (D, D), jnp.float32, -bound, bound),
        "bq": jax.random.uniform(keys[7], (D,), jnp.float32, -bound, bound),
        "wk": jax.random.uniform(keys[8], (D, D), jnp.float32, -bound, bound),
        "bk": jax.random.uniform(keys[9], (D,), jnp.float32, -bound, bound),
        "wv": jax.random.uniform(keys[10], (D, D), jnp.float32, -bound, bound),
        "bv": jax.random.uniform(keys[11], (D,), jnp.float32, -bound, bound),
        "wo": jax.random.uniform(keys[12], (D, D), jnp.float32, -bound, bound),
        "bo": jax.random.uniform(keys[13], (D,), jnp.float32, -bound, bound),
    }

    # attention_module(x) — external wrapped module (glue, not the adapter hot path)
    attn_out = mha_attention(x, attn_params, NUM_HEADS)

    # Pallas kernel: adapter forward
    prefix_fn = jax.jit(prefix_adapter_pallas)
    z = prefix_fn(x, attn_out, wq, bq, pk, pv, lam)
    z = jax.block_until_ready(z)

    # correctness check against pure-JAX f32 reference (bf16 MXU operands in kernel)
    z_ref = prefix_adapter_reference(x, attn_out, wq, bq, pk, pv, lam)
    np.testing.assert_allclose(np.asarray(z), np.asarray(z_ref), atol=2e-3, rtol=2e-3)

    print("KERNEL_OK")
</pallas_src>

<mosaic_0001>
module attributes {stable_mosaic.version = 11 : i64} {
  func.func @_prefix_adapter_kernel(%arg0: i32, %arg1: memref<16x128xbf16, #tpu.memory_space<vmem>>, %arg2: memref<16x128xf32, #tpu.memory_space<vmem>>, %arg3: memref<128x128xbf16, #tpu.memory_space<vmem>>, %arg4: memref<1x128xf32, #tpu.memory_space<vmem>>, %arg5: memref<128x256xbf16, #tpu.memory_space<vmem>>, %arg6: memref<256x128xbf16, #tpu.memory_space<vmem>>, %arg7: memref<256x128xbf16, #tpu.memory_space<vmem>>, %arg8: memref<1xf32, #tpu.memory_space<smem>>, %arg9: memref<16x128xf32, #tpu.memory_space<vmem>>) attributes {dimension_semantics = [#tpu.dimension_semantics<parallel>], iteration_bounds = array<i64: 1>, scalar_prefetch = 0 : i64, scratch_operands = 0 : i64, tpu.core_type = #tpu.core_type<tc>, window_params = [{transform_indices = @transform_0, window_bounds = array<i64: 16, 128>}, {transform_indices = @transform_1, window_bounds = array<i64: 16, 128>}, {pipeline_mode = #tpu.pipeline_mode<synchronous>, transform_indices = @transform_2, window_bounds = array<i64: 128, 128>}, {pipeline_mode = #tpu.pipeline_mode<synchronous>, transform_indices = @transform_3, window_bounds = array<i64: 1, 128>}, {pipeline_mode = #tpu.pipeline_mode<synchronous>, transform_indices = @transform_4, window_bounds = array<i64: 128, 256>}, {pipeline_mode = #tpu.pipeline_mode<synchronous>, transform_indices = @transform_5, window_bounds = array<i64: 256, 128>}, {pipeline_mode = #tpu.pipeline_mode<synchronous>, transform_indices = @transform_6, window_bounds = array<i64: 256, 128>}, {transform_indices = @transform_7, window_bounds = array<i64: 1>}, {transform_indices = @transform_8, window_bounds = array<i64: 16, 128>}]} {
    %c0 = arith.constant 0 : index
    %0 = memref.load %arg8[%c0] : memref<1xf32, #tpu.memory_space<smem>>
    %c0_0 = arith.constant 0 : index
    %c0_1 = arith.constant 0 : index
    %1 = vector.load %arg1[%c0_0, %c0_1] : memref<16x128xbf16, #tpu.memory_space<vmem>>, vector<16x128xbf16>
    %c0_2 = arith.constant 0 : index
    %c0_3 = arith.constant 0 : index
    %2 = vector.load %arg3[%c0_2, %c0_3] : memref<128x128xbf16, #tpu.memory_space<vmem>>, vector<128x128xbf16>
    %cst = arith.constant dense<0.000000e+00> : vector<16x128xf32>
    %3 = tpu.matmul %1, %2, %cst {dimension_numbers = #tpu.dot_dimension_numbers<[1], [0], [0], [1], [0, 0, 1, 1], [], []>} : vector<16x128xbf16>, vector<128x128xbf16>, vector<16x128xf32> -> vector<16x128xf32>
    %c0_4 = arith.constant 0 : index
    %c0_5 = arith.constant 0 : index
    %4 = vector.load %arg4[%c0_4, %c0_5] : memref<1x128xf32, #tpu.memory_space<vmem>>, vector<1x128xf32>
    %5 = vector.broadcast %4 : vector<1x128xf32> to vector<16x128xf32>
    %6 = arith.addf %3, %5 : vector<16x128xf32>
    %7 = arith.truncf %6 : vector<16x128xf32> to vector<16x128xbf16>
    %c0_6 = arith.constant 0 : index
    %c0_7 = arith.constant 0 : index
    %8 = vector.load %arg5[%c0_6, %c0_7] : memref<128x256xbf16, #tpu.memory_space<vmem>>, vector<128x256xbf16>
    %cst_8 = arith.constant dense<0.000000e+00> : vector<16x256xf32>
    %9 = tpu.matmul %7, %8, %cst_8 {dimension_numbers = #tpu.dot_dimension_numbers<[1], [0], [0], [1], [0, 0, 1, 1], [], []>} : vector<16x128xbf16>, vector<128x256xbf16>, vector<16x256xf32> -> vector<16x256xf32>
    %cst_9 = arith.constant dense<0xFF800000> : vector<16xf32>
    %10 = vector.multi_reduction <maximumf>, %9, %cst_9 [1] : vector<16x256xf32> to vector<16xf32>
    %11 = vector.shape_cast %10 : vector<16xf32> to vector<16x1xf32>
    %12 = vector.broadcast %11 : vector<16x1xf32> to vector<16x256xf32>
    %13 = arith.subf %9, %12 : vector<16x256xf32>
    %14 = math.exp %13 : vector<16x256xf32>
    %15 = arith.truncf %14 : vector<16x256xf32> to vector<16x256xbf16>
    %c0_10 = arith.constant 0 : index
    %c0_11 = arith.constant 0 : index
    %16 = vector.load %arg6[%c0_10, %c0_11] : memref<256x128xbf16, #tpu.memory_space<vmem>>, vector<256x128xbf16>
    %cst_12 = arith.constant dense<0.000000e+00> : vector<16x128xf32>
    %17 = tpu.matmul %15, %16, %cst_12 {dimension_numbers = #tpu.dot_dimension_numbers<[1], [0], [0], [1], [0, 0, 1, 1], [], []>} : vector<16x256xbf16>, vector<256x128xbf16>, vector<16x128xf32> -> vector<16x128xf32>
    %c0_13 = arith.constant 0 : index
    %c0_14 = arith.constant 0 : index
    %18 = vector.load %arg7[%c0_13, %c0_14] : memref<256x128xbf16, #tpu.memory_space<vmem>>, vector<256x128xbf16>
    %cst_15 = arith.constant dense<0.000000e+00> : vector<16x128xf32>
    %19 = tpu.matmul %15, %18, %cst_15 {dimension_numbers = #tpu.dot_dimension_numbers<[1], [0], [0], [1], [0, 0, 1, 1], [], []>} : vector<16x256xbf16>, vector<256x128xbf16>, vector<16x128xf32> -> vector<16x128xf32>
    %20 = tpu.reciprocal %19 {approx = true} : vector<16x128xf32> -> vector<16x128xf32>
    %21 = arith.mulf %17, %20 : vector<16x128xf32>
    %c0_16 = arith.constant 0 : index
    %c0_17 = arith.constant 0 : index
    %22 = vector.load %arg2[%c0_16, %c0_17] : memref<16x128xf32, #tpu.memory_space<vmem>>, vector<16x128xf32>
    %23 = arith.subf %21, %22 : vector<16x128xf32>
    %24 = vector.broadcast %0 : f32 to vector<16x128xf32>
    %25 = arith.mulf %24, %23 : vector<16x128xf32>
    %26 = arith.addf %22, %25 : vector<16x128xf32>
    %c0_18 = arith.constant 0 : index
    %c0_19 = arith.constant 0 : index
    %27 = vector.load %arg9[%c0_18, %c0_19] : memref<16x128xf32, #tpu.memory_space<vmem>>, vector<16x128xf32>
    tpu.vector_store %arg9[%c0_18, %c0_19], %26 {strides = array<i32>} : memref<16x128xf32, #tpu.memory_space<vmem>>, vector<16x128xf32>,
    return
  }
  func.func @transform_0(%arg0: i32) -> (i32, i32) {
    %c0_i32 = arith.constant 0 : i32
    %c0_i32_0 = arith.constant 0 : i32
    return %arg0, %c0_i32 : i32, i32
  }
  func.func @transform_1(%arg0: i32) -> (i32, i32) {
    %c0_i32 = arith.constant 0 : i32
    %c0_i32_0 = arith.constant 0 : i32
    return %arg0, %c0_i32 : i32, i32
  }
  func.func @transform_2(%arg0: i32) -> (i32, i32) {
    %c0_i32 = arith.constant 0 : i32
    %c0_i32_0 = arith.constant 0 : i32
    %c0_i32_1 = arith.constant 0 : i32
    return %c0_i32, %c0_i32_0 : i32, i32
  }
  func.func @transform_3(%arg0: i32) -> (i32, i32) {
    %c0_i32 = arith.constant 0 : i32
    %c0_i32_0 = arith.constant 0 : i32
    %c0_i32_1 = arith.constant 0 : i32
    return %c0_i32, %c0_i32_0 : i32, i32
  }
  func.func @transform_4(%arg0: i32) -> (i32, i32) {
    %c0_i32 = arith.constant 0 : i32
    %c0_i32_0 = arith.constant 0 : i32
    %c0_i32_1 = arith.constant 0 : i32
    return %c0_i32, %c0_i32_0 : i32, i32
  }
  func.func @transform_5(%arg0: i32) -> (i32, i32) {
    %c0_i32 = arith.constant 0 : i32
    %c0_i32_0 = arith.constant 0 : i32
    %c0_i32_1 = arith.constant 0 : i32
    return %c0_i32, %c0_i32_0 : i32, i32
  }
  func.func @transform_6(%arg0: i32) -> (i32, i32) {
    %c0_i32 = arith.constant 0 : i32
    %c0_i32_0 = arith.constant 0 : i32
    %c0_i32_1 = arith.constant 0 : i32
    return %c0_i32, %c0_i32_0 : i32, i32
  }
  func.func @transform_7(%arg0: i32) -> i32 {
    %c0_i32 = arith.constant 0 : i32
    %c0_i32_0 = arith.constant 0 : i32
    return %c0_i32 : i32
  }
  func.func @transform_8(%arg0: i32) -> (i32, i32) {
    %c0_i32 = arith.constant 0 : i32
    %c0_i32_0 = arith.constant 0 : i32
    return %arg0, %c0_i32 : i32, i32
  }
}

</mosaic_0001>

<llo_original>
// kernel: prefix_adapter_pallas.1
$region0: #{prefix_adapter_pallas.1}
  #allocation0 [shape = 'u32[]', space=smem, size = 0x4, offset = 0x4, fixed_abs, tag = 'smem constant byte address 0x4 - core index']
  #allocation1 [shape = 'u32[144,128]{1,0:T(1,128)}', space=vmem, size = 0x12000, scoped, tag = 'internal scratch']
  #allocation2 [shape = 'f32[1]{0:T(128)S(6)}', space=smem, size = 0x200, scoped, tag = 'scoped memory for prefix_adapter_pallas.1']
  %s0 = inlined_call_operand.vmem [shape: bf16[16,128], index: 0, kind: input, shape index: {}]
  %s1 = inlined_call_operand.vmem [shape: f32[16,128], index: 1, kind: input, shape index: {}]
  %s2 = inlined_call_operand.vmem [shape: bf16[128,128], index: 2, kind: input, shape index: {}]
  %s3 = inlined_call_operand.vmem [shape: f32[1,128], index: 3, kind: input, shape index: {}]
  %s4 = inlined_call_operand.vmem [shape: bf16[128,256], index: 4, kind: input, shape index: {}]
  %s5 = inlined_call_operand.vmem [shape: bf16[256,128], index: 5, kind: input, shape index: {}]
  %s6 = inlined_call_operand.vmem [shape: bf16[256,128], index: 6, kind: input, shape index: {}]
  %s7 = inlined_call_operand.<no memory space> [shape: f32[1], index: 7, kind: input, shape index: {}]
  %s8 = inlined_call_operand.vmem [shape: f32[16,128], index: 8, kind: output, shape index: {}]
  %s9 = sld [smem:[#allocation0]]
  $region42: #{prefix_adapter_pallas.1} parent=0
    _
  %s11 = ssub.s32 1, %s9
  %s12 = scalar_select 0, %s11, %s9
  %13 = sst [smem:[#allocation2]] %s7
  // Predicated region
  $region2: #{prefix_adapter_pallas.1} parent=0 // pred_check
    _
  $region3: #{prefix_adapter_pallas.1} parent=0 // pred_check_branch
    %15 = sbr.rel (0) target = $region5
  $region4: #{prefix_adapter_pallas.1} parent=0 // pred_region
    _
  $region5: #{prefix_adapter_pallas.1} parent=0 // pred_fallthru
    _
  // Predicated region
  $region6: #{prefix_adapter_pallas.1} parent=0 // pred_check
    _
  $region7: #{prefix_adapter_pallas.1} parent=0 // pred_check_branch
    %17 = sbr.rel (0) target = $region9
  $region8: #{prefix_adapter_pallas.1} parent=0 // pred_region
    _
  $region9: #{prefix_adapter_pallas.1} parent=0 // pred_fallthru
    _
  // Predicated region
  $region10: #{prefix_adapter_pallas.1} parent=0 // pred_check
    _
  $region11: #{prefix_adapter_pallas.1} parent=0 // pred_check_branch
    %19 = sbr.rel (0) target = $region13
  $region12: #{prefix_adapter_pallas.1} parent=0 // pred_region
    _
  $region13: #{prefix_adapter_pallas.1} parent=0 // pred_fallthru
    _
  // Predicated region
  $region14: #{prefix_adapter_pallas.1} parent=0 // pred_check
    _
  $region15: #{prefix_adapter_pallas.1} parent=0 // pred_check_branch
    %21 = sbr.rel (0) target = $region17
  $region16: #{prefix_adapter_pallas.1} parent=0 // pred_region
    _
  $region17: #{prefix_adapter_pallas.1} parent=0 // pred_fallthru
    _
  // Predicated region
  $region18: #{prefix_adapter_pallas.1} parent=0 // pred_check
    _
  $region19: #{prefix_adapter_pallas.1} parent=0 // pred_check_branch
    %23 = sbr.rel (0) target = $region21
  $region20: #{prefix_adapter_pallas.1} parent=0 // pred_region
    _
  $region21: #{prefix_adapter_pallas.1} parent=0 // pred_fallthru
    _
  // Predicated region
  $region22: #{prefix_adapter_pallas.1} parent=0 // pred_check
    _
  $region23: #{prefix_adapter_pallas.1} parent=0 // pred_check_branch
    %25 = sbr.rel (0) target = $region25
  $region24: #{prefix_adapter_pallas.1} parent=0 // pred_region
    _
  $region25: #{prefix_adapter_pallas.1} parent=0 // pred_fallthru
    _
  // Predicated region
  $region26: #{prefix_adapter_pallas.1} parent=0 // pred_check
    _
  $region27: #{prefix_adapter_pallas.1} parent=0 // pred_check_branch
    %27 = sbr.rel (0) target = $region29
  $region28: #{prefix_adapter_pallas.1} parent=0 // pred_region
    _
  $region29: #{prefix_adapter_pallas.1} parent=0 // pred_fallthru
    _
  // Predicated region
  $region30: #{prefix_adapter_pallas.1} parent=0 // pred_check
    _
  $region31: #{prefix_adapter_pallas.1} parent=0 // pred_check_branch
    %29 = sbr.rel (0) target = $region33
  $region32: #{prefix_adapter_pallas.1} parent=0 // pred_region
    _
  $region33: #{prefix_adapter_pallas.1} parent=0 // pred_fallthru
    _
  %s31 = sld [smem:[#allocation2]]
  %v32 = vld [vmem:[%s0] sm:$0xf]
  %v33 = vld [vmem:[%s0 + $0x4] sm:$0xf]
  %v34 = vld [vmem:[%s2] sm:$0xf]
  %v35 = vld [vmem:[%s2 + $0x4] sm:$0xf]
  %v36 = vld [vmem:[%s2 + $0x8] sm:$0xf]
  %v37 = vld [vmem:[%s2 + $0xc] sm:$0xf]
  %v38 = vld [vmem:[%s2 + $0x10] sm:$0xf]
  %v39 = vld [vmem:[%s2 + $0x14] sm:$0xf]
  %v40 = vld [vmem:[%s2 + $0x18] sm:$0xf]
  %v41 = vld [vmem:[%s2 + $0x1c] sm:$0xf]
  %v42 = vld [vmem:[%s2 + $0x20] sm:$0xf]
  %v43 = vld [vmem:[%s2 + $0x24] sm:$0xf]
  %v44 = vld [vmem:[%s2 + $0x28] sm:$0xf]
  %v45 = vld [vmem:[%s2 + $0x2c] sm:$0xf]
  %v46 = vld [vmem:[%s2 + $0x30] sm:$0xf]
  %v47 = vld [vmem:[%s2 + $0x34] sm:$0xf]
  %v48 = vld [vmem:[%s2 + $0x38] sm:$0xf]
  %v49 = vld [vmem:[%s2 + $0x3c] sm:$0xf]
  %v50 = vld [vmem:[%s3] sm:$0x1]
  %v52 = vlaneseq
  %v53 = vshrl.u32 %v52, 7
  %v54 = vsub.s32 0, %v53
  %v55 = vrot.slane %v50, %v54
  %v59 = vunpack.c.l.b16 %v32
  %v60 = vunpack.c.l.b16 %v33
  %v61 = vpack.c.b16 %v60, %v59
  %v79 = vunpack.c.l.b16 %v34
  %v80 = vunpack.c.l.b16 %v35
  %v81 = vunpack.c.l.b16 %v36
  %v82 = vunpack.c.l.b16 %v37
  %v83 = vunpack.c.l.b16 %v38
  %v84 = vunpack.c.l.b16 %v39
  %v85 = vunpack.c.l.b16 %v40
  %v86 = vunpack.c.l.b16 %v41
  %v87 = vunpack.c.l.b16 %v42
  %v88 = vunpack.c.l.b16 %v43
  %v89 = vunpack.c.l.b16 %v44
  %v90 = vunpack.c.l.b16 %v45
  %v91 = vunpack.c.l.b16 %v46
  %v92 = vunpack.c.l.b16 %v47
  %v93 = vunpack.c.l.b16 %v48
  %v94 = vunpack.c.l.b16 %v49
  %v95 = vpack.c.b16 %v80, %v79
  %v96 = vpack.c.b16 %v82, %v81
  %v97 = vpack.c.b16 %v84, %v83
  %v98 = vpack.c.b16 %v86, %v85
  %v99 = vpack.c.b16 %v88, %v87
  %v100 = vpack.c.b16 %v90, %v89
  %v101 = vpack.c.b16 %v92, %v91
  %v102 = vpack.c.b16 %v94, %v93
  %111 = vmatprep.subr.bf16.mxu0 0
  %112 = vmatpush1.bf16.msra.mxu0 %v102
  %113 = vmatprep.subr.bf16.mxu0 0
  %114 = vmatpush1.bf16.msra.mxu0 %v101
  %115 = vmatprep.subr.bf16.mxu0 0
  %116 = vmatpush1.bf16.msra.mxu0 %v100
  %117 = vmatprep.subr.bf16.mxu0 0
  %118 = vmatpush1.bf16.msra.mxu0 %v99
  %119 = vmatprep.subr.bf16.mxu0 0
  %120 = vmatpush1.bf16.msra.mxu0 %v98
  %121 = vmatprep.subr.bf16.mxu0 0
  %122 = vmatpush1.bf16.msra.mxu0 %v97
  %123 = vmatprep.subr.bf16.mxu0 0
  %124 = vmatpush1.bf16.msra.mxu0 %v96
  %125 = vmatprep.subr.bf16.mxu0 0
  %126 = vmatpush1.bf16.msra.mxu0 %v95
  %127 = vmatprep.subr.bf16.mxu0 0
  %128 = vmatpush2.bf16.msra.mxu0 0
  %129 = vmatprep.subr.bf16.mxu0 0
  %130 = vmatpush2.bf16.msra.mxu0 0
  %131 = vmatprep.subr.bf16.mxu0 0
  %132 = vmatpush2.bf16.msra.mxu0 0
  %133 = vmatprep.subr.bf16.mxu0 0
  %134 = vmatpush2.bf16.msra.mxu0 0
  %135 = vmatprep.subr.bf16.mxu0 0
  %136 = vmatpush2.bf16.msra.mxu0 0
  %137 = vmatprep.subr.bf16.mxu0 0
  %138 = vmatpush2.bf16.msra.mxu0 0
  %139 = vmatprep.subr.bf16.mxu0 0
  %140 = vmatpush2.bf16.msra.mxu0 0
  %141 = vmatprep.subr.bf16.mxu0 0
  %142 = vmatpush2.bf16.msra.mxu0 0
  %143 = vmatprep.mubr.bf16.mxu0 0
  %144 = vmatmul.mubr.bf16.gmra.mxu0 %v61
  %v145 = vpop.f32.mrf.mxu0
  %v146 = vadd.f32 %v55, %v145
  %v147 = vpop.f32.mrf.mxu0
  %v148 = vpop.f32.mrf.mxu0
  %v149 = vadd.f32 %v55, %v148
  %v150 = vpop.f32.mrf.mxu0
  %151 = vdwg.mxu0
  %v152 = vpack.c.bf16 %v149, %v146
  %v153 = vld [vmem:[%s4] sm:$0xff]
  %v154 = vld [vmem:[%s4 + $0x8] sm:$0xff]
  %v155 = vld [vmem:[%s4 + $0x10] sm:$0xff]
  %v156 = vld [vmem:[%s4 + $0x18] sm:$0xff]
  %v157 = vld [vmem:[%s4 + $0x20] sm:$0xff]
  %v158 = vld [vmem:[%s4 + $0x28] sm:$0xff]
  %v159 = vld [vmem:[%s4 + $0x30] sm:$0xff]
  %v160 = vld [vmem:[%s4 + $0x38] sm:$0xff]
  %v161 = vld [vmem:[%s4 + $0x40] sm:$0xff]
  %v162 = vld [vmem:[%s4 + $0x48] sm:$0xff]
  %v163 = vld [vmem:[%s4 + $0x50] sm:$0xff]
  %v164 = vld [vmem:[%s4 + $0x58] sm:$0xff]
  %v165 = vld [vmem:[%s4 + $0x60] sm:$0xff]
  %v166 = vld [vmem:[%s4 + $0x68] sm:$0xff]
  %v167 = vld [vmem:[%s4 + $0x70] sm:$0xff]
  %v168 = vld [vmem:[%s4 + $0x78] sm:$0xff]
  %v185 = vunpack.c.l.b16 %v153
  %v186 = vunpack.c.h.b16 %v153
  %v187 = vunpack.c.l.b16 %v154
  %v188 = vunpack.c.h.b16 %v154
  %v189 = vunpack.c.l.b16 %v155
  %v190 = vunpack.c.h.b16 %v155
  %v191 = vunpack.c.l.b16 %v156
  %v192 = vunpack.c.h.b16 %v156
  %v193 = vunpack.c.l.b16 %v157
  %v194 = vunpack.c.h.b16 %v157
  %v195 = vunpack.c.l.b16 %v158
  %v196 = vunpack.c.h.b16 %v158
  %v197 = vunpack.c.l.b16 %v159
  %v198 = vunpack.c.h.b16 %v159
  %v199 = vunpack.c.l.b16 %v160
  %v200 = vunpack.c.h.b16 %v160
  %v201 = vunpack.c.l.b16 %v161
  %v202 = vunpack.c.h.b16 %v161
  %v203 = vunpack.c.l.b16 %v162
  %v204 = vunpack.c.h.b16 %v162
  %v205 = vunpack.c.l.b16 %v163
  %v206 = vunpack.c.h.b16 %v163
  %v207 = vunpack.c.l.b16 %v164
  %v208 = vunpack.c.h.b16 %v164
  %v209 = vunpack.c.l.b16 %v165
  %v210 = vunpack.c.h.b16 %v165
  %v211 = vunpack.c.l.b16 %v166
  %v212 = vunpack.c.h.b16 %v166
  %v213 = vunpack.c.l.b16 %v167
  %v214 = vunpack.c.h.b16 %v167
  %v215 = vunpack.c.l.b16 %v168
  %v216 = vunpack.c.h.b16 %v168
  %v217 = vpack.c.b16 %v187, %v185
  %v218 = vpack.c.b16 %v188, %v186
  %v219 = vpack.c.b16 %v191, %v189
  %v220 = vpack.c.b16 %v192, %v190
  %v221 = vpack.c.b16 %v195, %v193
  %v222 = vpack.c.b16 %v196, %v194
  %v223 = vpack.c.b16 %v199, %v197
  %v224 = vpack.c.b16 %v200, %v198
  %v225 = vpack.c.b16 %v203, %v201
  %v226 = vpack.c.b16 %v204, %v202
  %v227 = vpack.c.b16 %v207, %v205
  %v228 = vpack.c.b16 %v208, %v206
  %v229 = vpack.c.b16 %v211, %v209
  %v230 = vpack.c.b16 %v212, %v210
  %v231 = vpack.c.b16 %v215, %v213
  %v232 = vpack.c.b16 %v216, %v214
  %249 = vmatprep.subr.bf16.mxu0 %v232
  %250 = vmatpush1.bf16.msra.mxu0 %v231
  %251 = vmatprep.subr.bf16.mxu0 %v230
  %252 = vmatpush1.bf16.msra.mxu0 %v229
  %253 = vmatprep.subr.bf16.mxu0 %v228
  %254 = vmatpush1.bf16.msra.mxu0 %v227
  %255 = vmatprep.subr.bf16.mxu0 %v226
  %256 = vmatpush1.bf16.msra.mxu0 %v225
  %257 = vmatprep.subr.bf16.mxu0 %v224
  %258 = vmatpush1.bf16.msra.mxu0 %v223
  %259 = vmatprep.subr.bf16.mxu0 %v222
  %260 = vmatpush1.bf16.msra.mxu0 %v221
  %261 = vmatprep.subr.bf16.mxu0 %v220
  %262 = vmatpush1.bf16.msra.mxu0 %v219
  %263 = vmatprep.subr.bf16.mxu0 %v218
  %264 = vmatpush1.bf16.msra.mxu0 %v217
  %265 = vmatprep.subr.bf16.mxu0 0
  %266 = vmatpush2.bf16.msra.mxu0 0
  %267 = vmatprep.subr.bf16.mxu0 0
  %268 = vmatpush2.bf16.msra.mxu0 0
  %269 = vmatprep.subr.bf16.mxu0 0
  %270 = vmatpush2.bf16.msra.mxu0 0
  %271 = vmatprep.subr.bf16.mxu0 0
  %272 = vmatpush2.bf16.msra.mxu0 0
  %273 = vmatprep.subr.bf16.mxu0 0
  %274 = vmatpush2.bf16.msra.mxu0 0
  %275 = vmatprep.subr.bf16.mxu0 0
  %276 = vmatpush2.bf16.msra.mxu0 0
  %277 = vmatprep.subr.bf16.mxu0 0
  %278 = vmatpush2.bf16.msra.mxu0 0
  %279 = vmatprep.subr.bf16.mxu0 0
  %280 = vmatpush2.bf16.msra.mxu0 0
  %281 = vmatprep.mubr.bf16.mxu0 0
  %282 = vmatmul.mubr.bf16.gmra.mxu0 %v152
  %v283 = vpop.f32.mrf.mxu0
  %v284 = vadd.f32 0.0, %v283
  %v285 = vpop.f32.mrf.mxu0
  %v286 = vadd.f32 0.0, %v285
  %v287 = vpop.f32.mrf.mxu0
  %v288 = vadd.f32 0.0, %v287
  %v289 = vpop.f32.mrf.mxu0
  %v290 = vadd.f32 0.0, %v289
  %291 = vdwg.mxu0
  %v292 = vmax.f32 %v284, %v286
  %293 = vmax.xlane.f32.xlu0 %v292
  %v294 = vpop.xlane.xlu0 %293
  %v295 = vmax.f32 %v288, %v290
  %296 = vmax.xlane.f32.xlu0 %v295
  %v297 = vpop.xlane.xlu0 %296
  %v298 = vsub.f32 %v284, %v294
  %v299 = vsub.f32 %v286, %v294
  %v300 = vsub.f32 %v288, %v297
  %v301 = vsub.f32 %v290, %v297
  %v302 = vmul.f32 %v298, 1.442695
  %v303 = vpow.pop %v302
  %v304 = vmul.f32 %v299, 1.442695
  %v305 = vpow.pop %v304
  %v306 = vmul.f32 %v300, 1.442695
  %v307 = vpow.pop %v306
  %v308 = vmul.f32 %v301, 1.442695
  %v309 = vpow.pop %v308
  %v310 = vpack.c.bf16 %v307, %v303
  %v311 = vpack.c.bf16 %v309, %v305
  %v312 = vld [vmem:[%s5] sm:$0xf]
  %v313 = vld [vmem:[%s5 + $0x4] sm:$0xf]
  %v314 = vld [vmem:[%s5 + $0x8] sm:$0xf]
  %v315 = vld [vmem:[%s5 + $0xc] sm:$0xf]
  %v316 = vld [vmem:[%s5 + $0x10] sm:$0xf]
  %v317 = vld [vmem:[%s5 + $0x14] sm:$0xf]
  %v318 = vld [vmem:[%s5 + $0x18] sm:$0xf]
  %v319 = vld [vmem:[%s5 + $0x1c] sm:$0xf]
  %v320 = vld [vmem:[%s5 + $0x20] sm:$0xf]
  %v321 = vld [vmem:[%s5 + $0x24] sm:$0xf]
  %v322 = vld [vmem:[%s5 + $0x28] sm:$0xf]
  %v323 = vld [vmem:[%s5 + $0x2c] sm:$0xf]
  %v324 = vld [vmem:[%s5 + $0x30] sm:$0xf]
  %v325 = vld [vmem:[%s5 + $0x34] sm:$0xf]
  %v326 = vld [vmem:[%s5 + $0x38] sm:$0xf]
  %v327 = vld [vmem:[%s5 + $0x3c] sm:$0xf]
  %v328 = vld [vmem:[%s5 + $0x40] sm:$0xf]
  %v329 = vld [vmem:[%s5 + $0x44] sm:$0xf]
  %v330 = vld [vmem:[%s5 + $0x48] sm:$0xf]
  %v331 = vld [vmem:[%s5 + $0x4c] sm:$0xf]
  %v332 = vld [vmem:[%s5 + $0x50] sm:$0xf]
  %v333 = vld [vmem:[%s5 + $0x54] sm:$0xf]
  %v334 = vld [vmem:[%s5 + $0x58] sm:$0xf]
  %v335 = vld [vmem:[%s5 + $0x5c] sm:$0xf]
  %v336 = vld [vmem:[%s5 + $0x60] sm:$0xf]
  %v337 = vld [vmem:[%s5 + $0x64] sm:$0xf]
  %v338 = vld [vmem:[%s5 + $0x68] sm:$0xf]
  %v339 = vld [vmem:[%s5 + $0x6c] sm:$0xf]
  %v340 = vld [vmem:[%s5 + $0x70] sm:$0xf]
  %v341 = vld [vmem:[%s5 + $0x74] sm:$0xf]
  %v342 = vld [vmem:[%s5 + $0x78] sm:$0xf]
  %v343 = vld [vmem:[%s5 + $0x7c] sm:$0xf]
  %v376 = vunpack.c.l.b16 %v312
  %v377 = vunpack.c.l.b16 %v313
  %v378 = vunpack.c.l.b16 %v314
  %v379 = vunpack.c.l.b16 %v315
  %v380 = vunpack.c.l.b16 %v316
  %v381 = vunpack.c.l.b16 %v317
  %v382 = vunpack.c.l.b16 %v318
  %v383 = vunpack.c.l.b16 %v319
  %v384 = vunpack.c.l.b16 %v320
  %v385 = vunpack.c.l.b16 %v321
  %v386 = vunpack.c.l.b16 %v322
  %v387 = vunpack.c.l.b16 %v323
  %v388 = vunpack.c.l.b16 %v324
  %v389 = vunpack.c.l.b16 %v325
  %v390 = vunpack.c.l.b16 %v326
  %v391 = vunpack.c.l.b16 %v327
  %v392 = vunpack.c.l.b16 %v328
  %v393 = vunpack.c.l.b16 %v329
  %v394 = vunpack.c.l.b16 %v330
  %v395 = vunpack.c.l.b16 %v331
  %v396 = vunpack.c.l.b16 %v332
  %v397 = vunpack.c.l.b16 %v333
  %v398 = vunpack.c.l.b16 %v334
  %v399 = vunpack.c.l.b16 %v335
  %v400 = vunpack.c.l.b16 %v336
  %v401 = vunpack.c.l.b16 %v337
  %v402 = vunpack.c.l.b16 %v338
  %v403 = vunpack.c.l.b16 %v339
  %v404 = vunpack.c.l.b16 %v340
  %v405 = vunpack.c.l.b16 %v341
  %v406 = vunpack.c.l.b16 %v342
  %v407 = vunpack.c.l.b16 %v343
  %v408 = vpack.c.b16 %v377, %v376
  %v409 = vpack.c.b16 %v379, %v378
  %v410 = vpack.c.b16 %v381, %v380
  %v411 = vpack.c.b16 %v383, %v382
  %v412 = vpack.c.b16 %v385, %v384
  %v413 = vpack.c.b16 %v387, %v386
  %v414 = vpack.c.b16 %v389, %v388
  %v415 = vpack.c.b16 %v391, %v390
  %v416 = vpack.c.b16 %v393, %v392
  %v417 = vpack.c.b16 %v395, %v394
  %v418 = vpack.c.b16 %v397, %v396
  %v419 = vpack.c.b16 %v399, %v398
  %v420 = vpack.c.b16 %v401, %v400
  %v421 = vpack.c.b16 %v403, %v402
  %v422 = vpack.c.b16 %v405, %v404
  %v423 = vpack.c.b16 %v407, %v406
  %440 = vmatprep.subr.bf16.mxu0 0
  %441 = vmatpush1.bf16.msra.mxu0 %v415
  %442 = vmatprep.subr.bf16.mxu0 0
  %443 = vmatpush1.bf16.msra.mxu0 %v414
  %444 = vmatprep.subr.bf16.mxu0 0
  %445 = vmatpush1.bf16.msra.mxu0 %v413
  %446 = vmatprep.subr.bf16.mxu0 0
  %447 = vmatpush1.bf16.msra.mxu0 %v412
  %448 = vmatprep.subr.bf16.mxu0 0
  %449 = vmatpush1.bf16.msra.mxu0 %v411
  %450 = vmatprep.subr.bf16.mxu0 0
  %451 = vmatpush1.bf16.msra.mxu0 %v410
  %452 = vmatprep.subr.bf16.mxu0 0
  %453 = vmatpush1.bf16.msra.mxu0 %v409
  %454 = vmatprep.subr.bf16.mxu0 0
  %455 = vmatpush1.bf16.msra.mxu0 %v408
  %456 = vmatprep.subr.bf16.mxu0 0
  %457 = vmatpush2.bf16.msra.mxu0 %v423
  %458 = vmatprep.subr.bf16.mxu0 0
  %459 = vmatpush2.bf16.msra.mxu0 %v422
  %460 = vmatprep.subr.bf16.mxu0 0
  %461 = vmatpush2.bf16.msra.mxu0 %v421
  %462 = vmatprep.subr.bf16.mxu0 0
  %463 = vmatpush2.bf16.msra.mxu0 %v420
  %464 = vmatprep.subr.bf16.mxu0 0
  %465 = vmatpush2.bf16.msra.mxu0 %v419
  %466 = vmatprep.subr.bf16.mxu0 0
  %467 = vmatpush2.bf16.msra.mxu0 %v418
  %468 = vmatprep.subr.bf16.mxu0 0
  %469 = vmatpush2.bf16.msra.mxu0 %v417
  %470 = vmatprep.subr.bf16.mxu0 0
  %471 = vmatpush2.bf16.msra.mxu0 %v416
  %472 = vmatprep.mubr.bf16.mxu0 %v311
  %473 = vmatmul.mubr.bf16.gmra.mxu0 %v310
  %v474 = vpop.f32.mrf.mxu0
  %v475 = vadd.f32 0.0, %v474
  %v476 = vpop.f32.mrf.mxu0
  %v477 = vpop.f32.mrf.mxu0
  %v478 = vadd.f32 0.0, %v477
  %v479 = vpop.f32.mrf.mxu0
  %480 = vdwg.mxu0
  %v481 = vld [vmem:[%s6] sm:$0xf]
  %v482 = vld [vmem:[%s6 + $0x4] sm:$0xf]
  %v483 = vld [vmem:[%s6 + $0x8] sm:$0xf]
  %v484 = vld [vmem:[%s6 + $0xc] sm:$0xf]
  %v485 = vld [vmem:[%s6 + $0x10] sm:$0xf]
  %v486 = vld [vmem:[%s6 + $0x14] sm:$0xf]
  %v487 = vld [vmem:[%s6 + $0x18] sm:$0xf]
  %v488 = vld [vmem:[%s6 + $0x1c] sm:$0xf]
  %v489 = vld [vmem:[%s6 + $0x20] sm:$0xf]
  %v490 = vld [vmem:[%s6 + $0x24] sm:$0xf]
  %v491 = vld [vmem:[%s6 + $0x28] sm:$0xf]
  %v492 = vld [vmem:[%s6 + $0x2c] sm:$0xf]
  %v493 = vld [vmem:[%s6 + $0x30] sm:$0xf]
  %v494 = vld [vmem:[%s6 + $0x34] sm:$0xf]
  %v495 = vld [vmem:[%s6 + $0x38] sm:$0xf]
  %v496 = vld [vmem:[%s6 + $0x3c] sm:$0xf]
  %v497 = vld [vmem:[%s6 + $0x40] sm:$0xf]
  %v498 = vld [vmem:[%s6 + $0x44] sm:$0xf]
  %v499 = vld [vmem:[%s6 + $0x48] sm:$0xf]
  %v500 = vld [vmem:[%s6 + $0x4c] sm:$0xf]
  %v501 = vld [vmem:[%s6 + $0x50] sm:$0xf]
  %v502 = vld [vmem:[%s6 + $0x54] sm:$0xf]
  %v503 = vld [vmem:[%s6 + $0x58] sm:$0xf]
  %v504 = vld [vmem:[%s6 + $0x5c] sm:$0xf]
  %v505 = vld [vmem:[%s6 + $0x60] sm:$0xf]
  %v506 = vld [vmem:[%s6 + $0x64] sm:$0xf]
  %v507 = vld [vmem:[%s6 + $0x68] sm:$0xf]
  %v508 = vld [vmem:[%s6 + $0x6c] sm:$0xf]
  %v509 = vld [vmem:[%s6 + $0x70] sm:$0xf]
  %v510 = vld [vmem:[%s6 + $0x74] sm:$0xf]
  %v511 = vld [vmem:[%s6 + $0x78] sm:$0xf]
  %v512 = vld [vmem:[%s6 + $0x7c] sm:$0xf]
  %v545 = vunpack.c.l.b16 %v481
  %v546 = vunpack.c.l.b16 %v482
  %v547 = vunpack.c.l.b16 %v483
  %v548 = vunpack.c.l.b16 %v484
  %v549 = vunpack.c.l.b16 %v485
  %v550 = vunpack.c.l.b16 %v486
  %v551 = vunpack.c.l.b16 %v487
  %v552 = vunpack.c.l.b16 %v488
  %v553 = vunpack.c.l.b16 %v489
  %v554 = vunpack.c.l.b16 %v490
  %v555 = vunpack.c.l.b16 %v491
  %v556 = vunpack.c.l.b16 %v492
  %v557 = vunpack.c.l.b16 %v493
  %v558 = vunpack.c.l.b16 %v494
  %v559 = vunpack.c.l.b16 %v495
  %v560 = vunpack.c.l.b16 %v496
  %v561 = vunpack.c.l.b16 %v497
  %v562 = vunpack.c.l.b16 %v498
  %v563 = vunpack.c.l.b16 %v499
  %v564 = vunpack.c.l.b16 %v500
  %v565 = vunpack.c.l.b16 %v501
  %v566 = vunpack.c.l.b16 %v502
  %v567 = vunpack.c.l.b16 %v503
  %v568 = vunpack.c.l.b16 %v504
  %v569 = vunpack.c.l.b16 %v505
  %v570 = vunpack.c.l.b16 %v506
  %v571 = vunpack.c.l.b16 %v507
  %v572 = vunpack.c.l.b16 %v508
  %v573 = vunpack.c.l.b16 %v509
  %v574 = vunpack.c.l.b16 %v510
  %v575 = vunpack.c.l.b16 %v511
  %v576 = vunpack.c.l.b16 %v512
  %v577 = vpack.c.b16 %v546, %v545
  %v578 = vpack.c.b16 %v548, %v547
  %v579 = vpack.c.b16 %v550, %v549
  %v580 = vpack.c.b16 %v552, %v551
  %v581 = vpack.c.b16 %v554, %v553
  %v582 = vpack.c.b16 %v556, %v555
  %v583 = vpack.c.b16 %v558, %v557
  %v584 = vpack.c.b16 %v560, %v559
  %v585 = vpack.c.b16 %v562, %v561
  %v586 = vpack.c.b16 %v564, %v563
  %v587 = vpack.c.b16 %v566, %v565
  %v588 = vpack.c.b16 %v568, %v567
  %v589 = vpack.c.b16 %v570, %v569
  %v590 = vpack.c.b16 %v572, %v571
  %v591 = vpack.c.b16 %v574, %v573
  %v592 = vpack.c.b16 %v576, %v575
  %609 = vmatprep.subr.bf16.mxu0 0
  %610 = vmatpush1.bf16.msra.mxu0 %v584
  %611 = vmatprep.subr.bf16.mxu0 0
  %612 = vmatpush1.bf16.msra.mxu0 %v583
  %613 = vmatprep.subr.bf16.mxu0 0
  %614 = vmatpush1.bf16.msra.mxu0 %v582
  %615 = vmatprep.subr.bf16.mxu0 0
  %616 = vmatpush1.bf16.msra.mxu0 %v581
  %617 = vmatprep.subr.bf16.mxu0 0
  %618 = vmatpush1.bf16.msra.mxu0 %v580
  %619 = vmatprep.subr.bf16.mxu0 0
  %620 = vmatpush1.bf16.msra.mxu0 %v579
  %621 = vmatprep.subr.bf16.mxu0 0
  %622 = vmatpush1.bf16.msra.mxu0 %v578
  %623 = vmatprep.subr.bf16.mxu0 0
  %624 = vmatpush1.bf16.msra.mxu0 %v577
  %625 = vmatprep.subr.bf16.mxu0 0
  %626 = vmatpush2.bf16.msra.mxu0 %v592
  %627 = vmatprep.subr.bf16.mxu0 0
  %628 = vmatpush2.bf16.msra.mxu0 %v591
  %629 = vmatprep.subr.bf16.mxu0 0
  %630 = vmatpush2.bf16.msra.mxu0 %v590
  %631 = vmatprep.subr.bf16.mxu0 0
  %632 = vmatpush2.bf16.msra.mxu0 %v589
  %633 = vmatprep.subr.bf16.mxu0 0
  %634 = vmatpush2.bf16.msra.mxu0 %v588
  %635 = vmatprep.subr.bf16.mxu0 0
  %636 = vmatpush2.bf16.msra.mxu0 %v587
  %637 = vmatprep.subr.bf16.mxu0 0
  %638 = vmatpush2.bf16.msra.mxu0 %v586
  %639 = vmatprep.subr.bf16.mxu0 0
  %640 = vmatpush2.bf16.msra.mxu0 %v585
  %641 = vmatprep.mubr.bf16.mxu0 %v311
  %642 = vmatmul.mubr.bf16.gmra.mxu0 %v310
  %v643 = vpop.f32.mrf.mxu0
  %v644 = vadd.f32 0.0, %v643
  %v645 = vpop.f32.mrf.mxu0
  %v646 = vpop.f32.mrf.mxu0
  %v647 = vadd.f32 0.0, %v646
  %v648 = vpop.f32.mrf.mxu0
  %649 = vdwg.mxu0
  %v650 = vrcp.pop %v644
  %v651 = vrcp.pop %v647
  %v652 = vmul.f32 %v475, %v650
  %v653 = vmul.f32 %v478, %v651
  %v654 = vld [vmem:[%s1] sm:$0xff]
  %v655 = vld [vmem:[%s1 + $0x8] sm:$0xff]
  %v656 = vsub.f32 %v652, %v654
  %v657 = vsub.f32 %v653, %v655
  %v658 = vstv %s31
  %v659 = vmul.f32 %v658, %v656
  %v660 = vmul.f32 %v658, %v657
  %v661 = vadd.f32 %v654, %v659
  %v662 = vadd.f32 %v655, %v660
  %663 = vst [vmem:[%s8] sm:$0xff] %v661
  %664 = vst [vmem:[%s8 + $0x8] sm:$0xff] %v662
  // Predicated region
  $region34: #{prefix_adapter_pallas.1} parent=0 // pred_check
    _
  $region35: #{prefix_adapter_pallas.1} parent=0 // pred_check_branch
    %666 = sbr.rel (0) target = $region37
  $region36: #{prefix_adapter_pallas.1} parent=0 // pred_region
    _
  $region37: #{prefix_adapter_pallas.1} parent=0 // pred_fallthru
    _
  // Predicated region
  $region38: #{prefix_adapter_pallas.1} parent=0 // pred_check
    _
  $region39: #{prefix_adapter_pallas.1} parent=0 // pred_check_branch
    %668 = sbr.rel (0) target = $region41
  $region40: #{prefix_adapter_pallas.1} parent=0 // pred_region
    _
  $region41: #{prefix_adapter_pallas.1} parent=0 // pred_fallthru
    _

</llo_original>
